<compile_context>
chip_gen: v7x
topology: tpu7x:2x2x1
jax: 0.10.0
libtpu: 0.0.40
codegen_flags: <defaults>
</compile_context>

<pallas_src>
import functools

import jax
import jax.numpy as jnp
from jax.experimental import pallas as pl
from jax.experimental.pallas import tpu as pltpu


def _se_kernel(x_ref, w1t_ref, b1_ref, alpha_ref, w2t_ref, b2_ref, o_ref):
    """One grid step over a (TB, C, HW) slab of x in native NCHW layout:
    C on sublanes, HW on lanes."""
    inv_hw = 1.0 / x_ref.shape[-1]

    # ---- squeeze: global average pool over the spatial (lane) axis ----
    # f32 accumulation; the scale step below re-reads x_ref in native dtype.
    pooled = jnp.sum(x_ref[...].astype(jnp.float32), axis=-1) * inv_hw   # (TB, C)

    # ---- excitation (f32): fc1 -> PReLU -> fc2 -> sigmoid ----
    h = jnp.dot(pooled, w1t_ref[...],
                preferred_element_type=jnp.float32) + b1_ref[...]        # (TB, Cr)
    h = jnp.where(h >= 0.0, h, alpha_ref[...] * h)                       # PReLU
    s = jnp.dot(h, w2t_ref[...],
                preferred_element_type=jnp.float32) + b2_ref[...]        # (TB, C)
    s = jax.nn.sigmoid(s).astype(o_ref.dtype)

    # ---- scale: streaming read-multiply-write in the input dtype ----
    # s is tiny; broadcasting it along the HW lane axis is a small in-kernel
    # relayout.  The big tile is read and written exactly once.
    o_ref[...] = x_ref[...] * s[:, :, None]


def _vmem_capacity_bytes():
    """Physical VMEM capacity; (capacity, query_succeeded)."""
    try:
        cap = int(pltpu.get_tpu_info().vmem_capacity_bytes)
        if cap > 0:
            return cap, True
    except Exception:
        pass
    return 64 * 1024 * 1024, False     # conservative (v7x-sized) fallback


def _pick_batch_tile(batch, per_b_bytes, fixed_bytes, vmem_target,
                     prefer_even_steps):
    """Largest divisor of `batch` whose pipelined x/out blocks (+ resident
    weights + headroom) fit `vmem_target`.  On 2-TC parts (v7x) prefer a tile
    that leaves an even number of grid steps (never shrinking the tile by
    more than 2x) so the parallel batch axis splits cleanly across cores."""
    divisors = [t for t in range(1, batch + 1) if batch % t == 0]
    fits = [t for t in divisors if t * per_b_bytes + fixed_bytes <= vmem_target]
    if not fits:
        return 1                       # cannot shrink further with this grid
    tb = max(fits)
    if prefer_even_steps:
        even = [t for t in fits if (batch // t) % 2 == 0]
        if even and 2 * max(even) >= tb:
            tb = max(even)
    return tb


@functools.partial(jax.jit, static_argnames=("batch_tile",))
def se_block(x, w1, b1, alpha, w2, b2, *, batch_tile=None):
    """x: (B, C, H, W).  Weights follow torch.nn conventions:
       w1: (C//r, C), b1: (C//r,), alpha: (C//r,), w2: (C, C//r), b2: (C,)."""
    B, C, H, W = x.shape
    Cr = w1.shape[0]
    HW = H * W
    itemsize = jnp.dtype(x.dtype).itemsize

    # Native layout, spatial dims merged (free, contiguous reshape).
    x_l = x.reshape(B, C, HW)

    # Pre-transpose Linear weights so the kernel does y @ W^T directly; the
    # excitation runs in f32 regardless of the activation dtype.
    w1t = jnp.asarray(w1, jnp.float32).T             # (C, Cr)
    w2t = jnp.asarray(w2, jnp.float32).T             # (Cr, C)
    b1r = jnp.asarray(b1, jnp.float32).reshape(1, Cr)
    b2r = jnp.asarray(b2, jnp.float32).reshape(1, C)
    alphar = jnp.asarray(alpha, jnp.float32).reshape(1, Cr)

    weight_bytes = (2 * C * Cr + 2 * Cr + 2 * C) * 4

    # ---- VMEM-budget-driven batch tiling ----
    vmem_capacity, info_ok = _vmem_capacity_bytes()
    # Per batch element: double-buffered input + double-buffered output block,
    # plus (for sub-32-bit inputs) a possible full-tile f32 temp from the
    # pooled reduction.
    cast_temp_per_b = HW * C * 4 if itemsize < 4 else 0
    per_b_total = 4 * HW * C * itemsize + cast_temp_per_b
    fixed_bytes = 2 * weight_bytes + (2 << 20)        # resident weights + headroom
    vmem_target = int(vmem_capacity * 0.8)            # ~51 MiB v7x, ~102 MiB v5e/v6e
    prefer_even = info_ok and vmem_capacity <= 64 * 1024 * 1024   # v7x: 2 TCs

    if batch_tile is None:
        tb = _pick_batch_tile(B, per_b_total, fixed_bytes, vmem_target,
                              prefer_even)
    else:
        tb = batch_tile
    assert B % tb == 0, "batch tile must divide batch"
    grid = (B // tb,)

    block = (tb, C, HW)                 # last two dims = full array dims
    x_spec = pl.BlockSpec(block, lambda b: (b, 0, 0))
    o_spec = pl.BlockSpec(block, lambda b: (b, 0, 0))

    # Small operands: constant index maps -> resident in VMEM across steps.
    w_specs = [
        pl.BlockSpec((C, Cr), lambda b: (0, 0)),   # w1^T
        pl.BlockSpec((1, Cr), lambda b: (0, 0)),   # b1
        pl.BlockSpec((1, Cr), lambda b: (0, 0)),   # prelu alpha
        pl.BlockSpec((Cr, C), lambda b: (0, 0)),   # w2^T
        pl.BlockSpec((1, C), lambda b: (0, 0)),    # b2
    ]

    # VMEM limit: what this tiling actually needs, never claiming the full
    # physical capacity (headroom for compiler scratch).
    needed = tb * per_b_total + fixed_bytes
    vmem_cap = int(vmem_capacity * 0.875)          # ~56 MiB v7x, ~112 MiB v5e/v6e
    vmem_limit = int(min(max(needed, 32 * 1024 * 1024), vmem_cap))

    cost = pl.CostEstimate(
        flops=(2 * B * C * HW              # pool sum + scale multiply
               + 4 * B * C * Cr            # the two FC matmuls
               + 3 * B * (C + Cr)),        # biases, PReLU, 1/HW scaling
        transcendentals=B * C,             # sigmoid
        bytes_accessed=2 * B * C * HW * itemsize + weight_bytes,
    )

    out = pl.pallas_call(
        _se_kernel,
        out_shape=jax.ShapeDtypeStruct((B, C, HW), x.dtype),
        grid_spec=pltpu.PrefetchScalarGridSpec(
            num_scalar_prefetch=0,
            grid=grid,
            in_specs=[x_spec] + w_specs,
            out_specs=o_spec,
        ),
        compiler_params=pltpu.CompilerParams(
            dimension_semantics=("parallel",),
            vmem_limit_bytes=vmem_limit,
        ),
        cost_estimate=cost,
    )(x_l, w1t, b1r, alphar, w2t, b2r)

    # Free reshape back to NCHW (no data movement).
    return out.reshape(B, C, H, W)


def se_block_ref(x, w1, b1, alpha, w2, b2):
    """Plain-JAX reference mirroring the PyTorch forward."""
    y = jnp.mean(x, axis=(2, 3))                       # (B, C)
    h = y @ w1.T + b1                                  # (B, Cr)
    h = jnp.where(h >= 0, h, alpha[None, :] * h)       # PReLU
    s = jax.nn.sigmoid(h @ w2.T + b2)                  # (B, C)
    return x * s[:, :, None, None]


if __name__ == "__main__":
    B, C, H, W = 2, 128, 16, 16
    reduction = 16
    Cr = C // reduction                                # 8

    key = jax.random.PRNGKey(0)
    kx, k1, kb1, k2, kb2 = jax.random.split(key, 5)

    x = jax.random.normal(kx, (B, C, H, W), dtype=jnp.float32)
    # Deterministic synthetic parameters (shapes per nn.Linear / nn.PReLU).
    w1 = jax.random.normal(k1, (Cr, C), dtype=jnp.float32) * 0.1
    b1 = jax.random.normal(kb1, (Cr,), dtype=jnp.float32) * 0.1
    alpha = jnp.full((Cr,), 0.25, dtype=jnp.float32)   # PReLU default init
    w2 = jax.random.normal(k2, (C, Cr), dtype=jnp.float32) * 0.1
    b2 = jax.random.normal(kb2, (C,), dtype=jnp.float32) * 0.1

    out = jax.block_until_ready(se_block(x, w1, b1, alpha, w2, b2))
    ref = se_block_ref(x, w1, b1, alpha, w2, b2)

    assert out.shape == (B, C, H, W)
    # Tolerance allows for MXU default-precision differences in the tiny FC
    # matmuls between the in-kernel dots and the XLA reference path.
    assert jnp.allclose(out, ref, atol=1e-3, rtol=1e-3), "mismatch vs reference"

    print("KERNEL_OK")
</pallas_src>

<mosaic_0001>
module attributes {stable_mosaic.version = 11 : i64} {
  func.func @_se_kernel(%arg0: i32, %arg1: memref<2x128x256xf32, #tpu.memory_space<vmem>>, %arg2: memref<128x8xf32, #tpu.memory_space<vmem>>, %arg3: memref<1x8xf32, #tpu.memory_space<vmem>>, %arg4: memref<1x8xf32, #tpu.memory_space<vmem>>, %arg5: memref<8x128xf32, #tpu.memory_space<vmem>>, %arg6: memref<1x128xf32, #tpu.memory_space<vmem>>, %arg7: memref<2x128x256xf32, #tpu.memory_space<vmem>>) attributes {dimension_semantics = [#tpu.dimension_semantics<parallel>], iteration_bounds = array<i64: 1>, scalar_prefetch = 0 : i64, scratch_operands = 0 : i64, tpu.core_type = #tpu.core_type<tc>, window_params = [{transform_indices = @transform_0, window_bounds = array<i64: 2, 128, 256>}, {pipeline_mode = #tpu.pipeline_mode<synchronous>, transform_indices = @transform_1, window_bounds = array<i64: 128, 8>}, {pipeline_mode = #tpu.pipeline_mode<synchronous>, transform_indices = @transform_2, window_bounds = array<i64: 1, 8>}, {pipeline_mode = #tpu.pipeline_mode<synchronous>, transform_indices = @transform_3, window_bounds = array<i64: 1, 8>}, {pipeline_mode = #tpu.pipeline_mode<synchronous>, transform_indices = @transform_4, window_bounds = array<i64: 8, 128>}, {pipeline_mode = #tpu.pipeline_mode<synchronous>, transform_indices = @transform_5, window_bounds = array<i64: 1, 128>}, {transform_indices = @transform_6, window_bounds = array<i64: 2, 128, 256>}]} {
    %c0 = arith.constant 0 : index
    %c0_0 = arith.constant 0 : index
    %c0_1 = arith.constant 0 : index
    %0 = vector.load %arg1[%c0, %c0_0, %c0_1] : memref<2x128x256xf32, #tpu.memory_space<vmem>>, vector<2x128x256xf32>
    %cst = arith.constant dense<0.000000e+00> : vector<2x128xf32>
    %1 = vector.multi_reduction <add>, %0, %cst [2] : vector<2x128x256xf32> to vector<2x128xf32>
    %cst_2 = arith.constant 3.906250e-03 : f32
    %2 = vector.broadcast %cst_2 : f32 to vector<2x128xf32>
    %3 = arith.mulf %1, %2 : vector<2x128xf32>
    %c0_3 = arith.constant 0 : index
    %c0_4 = arith.constant 0 : index
    %4 = vector.load %arg2[%c0_3, %c0_4] : memref<128x8xf32, #tpu.memory_space<vmem>>, vector<128x8xf32>
    %cst_5 = arith.constant dense<0.000000e+00> : vector<2x8xf32>
    %5 = tpu.matmul %3, %4, %cst_5 {dimension_numbers = #tpu.dot_dimension_numbers<[1], [0], [0], [1], [0, 0, 1, 1], [], []>} : vector<2x128xf32>, vector<128x8xf32>, vector<2x8xf32> -> vector<2x8xf32>
    %c0_6 = arith.constant 0 : index
    %c0_7 = arith.constant 0 : index
    %6 = vector.load %arg3[%c0_6, %c0_7] : memref<1x8xf32, #tpu.memory_space<vmem>>, vector<1x8xf32>
    %7 = vector.broadcast %6 : vector<1x8xf32> to vector<2x8xf32>
    %8 = arith.addf %5, %7 : vector<2x8xf32>
    %cst_8 = arith.constant 0.000000e+00 : f32
    %9 = vector.broadcast %cst_8 : f32 to vector<2x8xf32>
    %10 = arith.cmpf oge, %8, %9 : vector<2x8xf32>
    %c0_9 = arith.constant 0 : index
    %c0_10 = arith.constant 0 : index
    %11 = vector.load %arg4[%c0_9, %c0_10] : memref<1x8xf32, #tpu.memory_space<vmem>>, vector<1x8xf32>
    %12 = vector.broadcast %11 : vector<1x8xf32> to vector<2x8xf32>
    %13 = arith.mulf %12, %8 : vector<2x8xf32>
    %14 = arith.select %10, %8, %13 : vector<2x8xi1>, vector<2x8xf32>
    %c0_11 = arith.constant 0 : index
    %c0_12 = arith.constant 0 : index
    %15 = vector.load %arg5[%c0_11, %c0_12] : memref<8x128xf32, #tpu.memory_space<vmem>>, vector<8x128xf32>
    %cst_13 = arith.constant dense<0.000000e+00> : vector<2x128xf32>
    %16 = tpu.matmul %14, %15, %cst_13 {dimension_numbers = #tpu.dot_dimension_numbers<[1], [0], [0], [1], [0, 0, 1, 1], [], []>} : vector<2x8xf32>, vector<8x128xf32>, vector<2x128xf32> -> vector<2x128xf32>
    %c0_14 = arith.constant 0 : index
    %c0_15 = arith.constant 0 : index
    %17 = vector.load %arg6[%c0_14, %c0_15] : memref<1x128xf32, #tpu.memory_space<vmem>>, vector<1x128xf32>
    %18 = vector.broadcast %17 : vector<1x128xf32> to vector<2x128xf32>
    %19 = arith.addf %16, %18 : vector<2x128xf32>
    %20 = arith.negf %19 : vector<2x128xf32>
    %21 = math.exp %20 : vector<2x128xf32>
    %cst_16 = arith.constant 1.000000e+00 : f32
    %22 = vector.broadcast %cst_16 : f32 to vector<2x128xf32>
    %23 = arith.addf %22, %21 : vector<2x128xf32>
    %24 = arith.divf %22, %23 : vector<2x128xf32>
    %c0_17 = arith.constant 0 : index
    %c0_18 = arith.constant 0 : index
    %c0_19 = arith.constant 0 : index
    %25 = vector.load %arg1[%c0_17, %c0_18, %c0_19] : memref<2x128x256xf32, #tpu.memory_space<vmem>>, vector<2x128x256xf32>
    %26 = vector.shape_cast %24 : vector<2x128xf32> to vector<2x128x1xf32>
    %27 = vector.broadcast %26 : vector<2x128x1xf32> to vector<2x128x256xf32>
    %28 = arith.mulf %25, %27 : vector<2x128x256xf32>
    %c0_20 = arith.constant 0 : index
    %c0_21 = arith.constant 0 : index
    %c0_22 = arith.constant 0 : index
    %29 = vector.load %arg7[%c0_20, %c0_21, %c0_22] : memref<2x128x256xf32, #tpu.memory_space<vmem>>, vector<2x128x256xf32>
    tpu.vector_store %arg7[%c0_20, %c0_21, %c0_22], %28 {strides = array<i32>} : memref<2x128x256xf32, #tpu.memory_space<vmem>>, vector<2x128x256xf32>,
    return
  }
  func.func @transform_0(%arg0: i32) -> (i32, i32, i32) {
    %c0_i32 = arith.constant 0 : i32
    %c0_i32_0 = arith.constant 0 : i32
    %c0_i32_1 = arith.constant 0 : i32
    return %arg0, %c0_i32, %c0_i32_0 : i32, i32, i32
  }
  func.func @transform_1(%arg0: i32) -> (i32, i32) {
    %c0_i32 = arith.constant 0 : i32
    %c0_i32_0 = arith.constant 0 : i32
    %c0_i32_1 = arith.constant 0 : i32
    return %c0_i32, %c0_i32_0 : i32, i32
  }
  func.func @transform_2(%arg0: i32) -> (i32, i32) {
    %c0_i32 = arith.constant 0 : i32
    %c0_i32_0 = arith.constant 0 : i32
    %c0_i32_1 = arith.constant 0 : i32
    return %c0_i32, %c0_i32_0 : i32, i32
  }
  func.func @transform_3(%arg0: i32) -> (i32, i32) {
    %c0_i32 = arith.constant 0 : i32
    %c0_i32_0 = arith.constant 0 : i32
    %c0_i32_1 = arith.constant 0 : i32
    return %c0_i32, %c0_i32_0 : i32, i32
  }
  func.func @transform_4(%arg0: i32) -> (i32, i32) {
    %c0_i32 = arith.constant 0 : i32
    %c0_i32_0 = arith.constant 0 : i32
    %c0_i32_1 = arith.constant 0 : i32
    return %c0_i32, %c0_i32_0 : i32, i32
  }
  func.func @transform_5(%arg0: i32) -> (i32, i32) {
    %c0_i32 = arith.constant 0 : i32
    %c0_i32_0 = arith.constant 0 : i32
    %c0_i32_1 = arith.constant 0 : i32
    return %c0_i32, %c0_i32_0 : i32, i32
  }
  func.func @transform_6(%arg0: i32) -> (i32, i32, i32) {
    %c0_i32 = arith.constant 0 : i32
    %c0_i32_0 = arith.constant 0 : i32
    %c0_i32_1 = arith.constant 0 : i32
    return %arg0, %c0_i32, %c0_i32_0 : i32, i32, i32
  }
}

</mosaic_0001>

<llo_original>
// kernel: se_block.1
$region0: #{se_block.1}
  #allocation0 [shape = 'u32[]', space=smem, size = 0x4, offset = 0x4, fixed_abs, tag = 'smem constant byte address 0x4 - core index']
  #allocation1 [shape = 'u32[144,128]{1,0:T(1,128)}', space=vmem, size = 0x12000, scoped, tag = 'internal scratch']
  %s0 = inlined_call_operand.vmem [shape: f32[2,128,256], index: 0, kind: input, shape index: {}]
  %s1 = inlined_call_operand.vmem [shape: f32[128,8], index: 1, kind: input, shape index: {}]
  %s2 = inlined_call_operand.vmem [shape: f32[1,8], index: 2, kind: input, shape index: {}]
  %s3 = inlined_call_operand.vmem [shape: f32[1,8], index: 3, kind: input, shape index: {}]
  %s4 = inlined_call_operand.vmem [shape: f32[8,128], index: 4, kind: input, shape index: {}]
  %s5 = inlined_call_operand.vmem [shape: f32[1,128], index: 5, kind: input, shape index: {}]
  %s6 = inlined_call_operand.vmem [shape: f32[2,128,256], index: 6, kind: output, shape index: {}]
  %s7 = sld [smem:[#allocation0]]
  $region34: #{se_block.1} parent=0
    _
  %s9 = ssub.s32 1, %s7
  %s10 = scalar_select 0, %s9, %s7
  // Predicated region
  $region2: #{se_block.1} parent=0 // pred_check
    _
  $region3: #{se_block.1} parent=0 // pred_check_branch
    %12 = sbr.rel (0) target = $region5
  $region4: #{se_block.1} parent=0 // pred_region
    _
  $region5: #{se_block.1} parent=0 // pred_fallthru
    _
  // Predicated region
  $region6: #{se_block.1} parent=0 // pred_check
    _
  $region7: #{se_block.1} parent=0 // pred_check_branch
    %14 = sbr.rel (0) target = $region9
  $region8: #{se_block.1} parent=0 // pred_region
    _
  $region9: #{se_block.1} parent=0 // pred_fallthru
    _
  // Predicated region
  $region10: #{se_block.1} parent=0 // pred_check
    _
  $region11: #{se_block.1} parent=0 // pred_check_branch
    %16 = sbr.rel (0) target = $region13
  $region12: #{se_block.1} parent=0 // pred_region
    _
  $region13: #{se_block.1} parent=0 // pred_fallthru
    _
  // Predicated region
  $region14: #{se_block.1} parent=0 // pred_check
    _
  $region15: #{se_block.1} parent=0 // pred_check_branch
    %18 = sbr.rel (0) target = $region17
  $region16: #{se_block.1} parent=0 // pred_region
    _
  $region17: #{se_block.1} parent=0 // pred_fallthru
    _
  // Predicated region
  $region18: #{se_block.1} parent=0 // pred_check
    _
  $region19: #{se_block.1} parent=0 // pred_check_branch
    %20 = sbr.rel (0) target = $region21
  $region20: #{se_block.1} parent=0 // pred_region
    _
  $region21: #{se_block.1} parent=0 // pred_fallthru
    _
  // Predicated region
  $region22: #{se_block.1} parent=0 // pred_check
    _
  $region23: #{se_block.1} parent=0 // pred_check_branch
    %22 = sbr.rel (0) target = $region25
  $region24: #{se_block.1} parent=0 // pred_region
    _
  $region25: #{se_block.1} parent=0 // pred_fallthru
    _
  %v23 = vld [vmem:[%s0] sm:$0xff]
  %v24 = vld [vmem:[%s0 + $0x8] sm:$0xff]
  %v25 = vld [vmem:[%s0 + $0x10] sm:$0xff]
  %v26 = vld [vmem:[%s0 + $0x18] sm:$0xff]
  %v27 = vld [vmem:[%s0 + $0x20] sm:$0xff]
  %v28 = vld [vmem:[%s0 + $0x28] sm:$0xff]
  %v29 = vld [vmem:[%s0 + $0x30] sm:$0xff]
  %v30 = vld [vmem:[%s0 + $0x38] sm:$0xff]
  %v31 = vld [vmem:[%s0 + $0x40] sm:$0xff]
  %v32 = vld [vmem:[%s0 + $0x48] sm:$0xff]
  %v33 = vld [vmem:[%s0 + $0x50] sm:$0xff]
  %v34 = vld [vmem:[%s0 + $0x58] sm:$0xff]
  %v35 = vld [vmem:[%s0 + $0x60] sm:$0xff]
  %v36 = vld [vmem:[%s0 + $0x68] sm:$0xff]
  %v37 = vld [vmem:[%s0 + $0x70] sm:$0xff]
  %v38 = vld [vmem:[%s0 + $0x78] sm:$0xff]
  %v39 = vld [vmem:[%s0 + $0x80] sm:$0xff]
  %v40 = vld [vmem:[%s0 + $0x88] sm:$0xff]
  %v41 = vld [vmem:[%s0 + $0x90] sm:$0xff]
  %v42 = vld [vmem:[%s0 + $0x98] sm:$0xff]
  %v43 = vld [vmem:[%s0 + $0xa0] sm:$0xff]
  %v44 = vld [vmem:[%s0 + $0xa8] sm:$0xff]
  %v45 = vld [vmem:[%s0 + $0xb0] sm:$0xff]
  %v46 = vld [vmem:[%s0 + $0xb8] sm:$0xff]
  %v47 = vld [vmem:[%s0 + $0xc0] sm:$0xff]
  %v48 = vld [vmem:[%s0 + $0xc8] sm:$0xff]
  %v49 = vld [vmem:[%s0 + $0xd0] sm:$0xff]
  %v50 = vld [vmem:[%s0 + $0xd8] sm:$0xff]
  %v51 = vld [vmem:[%s0 + $0xe0] sm:$0xff]
  %v52 = vld [vmem:[%s0 + $0xe8] sm:$0xff]
  %v53 = vld [vmem:[%s0 + $0xf0] sm:$0xff]
  %v54 = vld [vmem:[%s0 + $0xf8] sm:$0xff]
  %v55 = vld [vmem:[%s0 + $0x100] sm:$0xff]
  %v56 = vld [vmem:[%s0 + $0x108] sm:$0xff]
  %v57 = vld [vmem:[%s0 + $0x110] sm:$0xff]
  %v58 = vld [vmem:[%s0 + $0x118] sm:$0xff]
  %v59 = vld [vmem:[%s0 + $0x120] sm:$0xff]
  %v60 = vld [vmem:[%s0 + $0x128] sm:$0xff]
  %v61 = vld [vmem:[%s0 + $0x130] sm:$0xff]
  %v62 = vld [vmem:[%s0 + $0x138] sm:$0xff]
  %v63 = vld [vmem:[%s0 + $0x140] sm:$0xff]
  %v64 = vld [vmem:[%s0 + $0x148] sm:$0xff]
  %v65 = vld [vmem:[%s0 + $0x150] sm:$0xff]
  %v66 = vld [vmem:[%s0 + $0x158] sm:$0xff]
  %v67 = vld [vmem:[%s0 + $0x160] sm:$0xff]
  %v68 = vld [vmem:[%s0 + $0x168] sm:$0xff]
  %v69 = vld [vmem:[%s0 + $0x170] sm:$0xff]
  %v70 = vld [vmem:[%s0 + $0x178] sm:$0xff]
  %v71 = vld [vmem:[%s0 + $0x180] sm:$0xff]
  %v72 = vld [vmem:[%s0 + $0x188] sm:$0xff]
  %v73 = vld [vmem:[%s0 + $0x190] sm:$0xff]
  %v74 = vld [vmem:[%s0 + $0x198] sm:$0xff]
  %v75 = vld [vmem:[%s0 + $0x1a0] sm:$0xff]
  %v76 = vld [vmem:[%s0 + $0x1a8] sm:$0xff]
  %v77 = vld [vmem:[%s0 + $0x1b0] sm:$0xff]
  %v78 = vld [vmem:[%s0 + $0x1b8] sm:$0xff]
  %v79 = vld [vmem:[%s0 + $0x1c0] sm:$0xff]
  %v80 = vld [vmem:[%s0 + $0x1c8] sm:$0xff]
  %v81 = vld [vmem:[%s0 + $0x1d0] sm:$0xff]
  %v82 = vld [vmem:[%s0 + $0x1d8] sm:$0xff]
  %v83 = vld [vmem:[%s0 + $0x1e0] sm:$0xff]
  %v84 = vld [vmem:[%s0 + $0x1e8] sm:$0xff]
  %v85 = vld [vmem:[%s0 + $0x1f0] sm:$0xff]
  %v86 = vld [vmem:[%s0 + $0x1f8] sm:$0xff]
  %v87 = vadd.f32 %v23, %v24
  %88 = vadd.xlane.f32.xlu0 %v87
  %v89 = vpop.xlane.xlu0 %88
  %v90 = vadd.f32 %v25, %v26
  %91 = vadd.xlane.f32.xlu0 %v90
  %v92 = vpop.xlane.xlu0 %91
  %v93 = vadd.f32 %v27, %v28
  %94 = vadd.xlane.f32.xlu0 %v93
  %v95 = vpop.xlane.xlu0 %94
  %v96 = vadd.f32 %v29, %v30
  %97 = vadd.xlane.f32.xlu0 %v96
  %v98 = vpop.xlane.xlu0 %97
  %v99 = vadd.f32 %v31, %v32
  %100 = vadd.xlane.f32.xlu0 %v99
  %v101 = vpop.xlane.xlu0 %100
  %v102 = vadd.f32 %v33, %v34
  %103 = vadd.xlane.f32.xlu0 %v102
  %v104 = vpop.xlane.xlu0 %103
  %v105 = vadd.f32 %v35, %v36
  %106 = vadd.xlane.f32.xlu0 %v105
  %v107 = vpop.xlane.xlu0 %106
  %v108 = vadd.f32 %v37, %v38
  %109 = vadd.xlane.f32.xlu0 %v108
  %v110 = vpop.xlane.xlu0 %109
  %v111 = vadd.f32 %v39, %v40
  %112 = vadd.xlane.f32.xlu0 %v111
  %v113 = vpop.xlane.xlu0 %112
  %v114 = vadd.f32 %v41, %v42
  %115 = vadd.xlane.f32.xlu0 %v114
  %v116 = vpop.xlane.xlu0 %115
  %v117 = vadd.f32 %v43, %v44
  %118 = vadd.xlane.f32.xlu0 %v117
  %v119 = vpop.xlane.xlu0 %118
  %v120 = vadd.f32 %v45, %v46
  %121 = vadd.xlane.f32.xlu0 %v120
  %v122 = vpop.xlane.xlu0 %121
  %v123 = vadd.f32 %v47, %v48
  %124 = vadd.xlane.f32.xlu0 %v123
  %v125 = vpop.xlane.xlu0 %124
  %v126 = vadd.f32 %v49, %v50
  %127 = vadd.xlane.f32.xlu0 %v126
  %v128 = vpop.xlane.xlu0 %127
  %v129 = vadd.f32 %v51, %v52
  %130 = vadd.xlane.f32.xlu0 %v129
  %v131 = vpop.xlane.xlu0 %130
  %v132 = vadd.f32 %v53, %v54
  %133 = vadd.xlane.f32.xlu0 %v132
  %v134 = vpop.xlane.xlu0 %133
  %v135 = vadd.f32 %v55, %v56
  %136 = vadd.xlane.f32.xlu0 %v135
  %v137 = vpop.xlane.xlu0 %136
  %v138 = vadd.f32 %v57, %v58
  %139 = vadd.xlane.f32.xlu0 %v138
  %v140 = vpop.xlane.xlu0 %139
  %v141 = vadd.f32 %v59, %v60
  %142 = vadd.xlane.f32.xlu0 %v141
  %v143 = vpop.xlane.xlu0 %142
  %v144 = vadd.f32 %v61, %v62
  %145 = vadd.xlane.f32.xlu0 %v144
  %v146 = vpop.xlane.xlu0 %145
  %v147 = vadd.f32 %v63, %v64
  %148 = vadd.xlane.f32.xlu0 %v147
  %v149 = vpop.xlane.xlu0 %148
  %v150 = vadd.f32 %v65, %v66
  %151 = vadd.xlane.f32.xlu0 %v150
  %v152 = vpop.xlane.xlu0 %151
  %v153 = vadd.f32 %v67, %v68
  %154 = vadd.xlane.f32.xlu0 %v153
  %v155 = vpop.xlane.xlu0 %154
  %v156 = vadd.f32 %v69, %v70
  %157 = vadd.xlane.f32.xlu0 %v156
  %v158 = vpop.xlane.xlu0 %157
  %v159 = vadd.f32 %v71, %v72
  %160 = vadd.xlane.f32.xlu0 %v159
  %v161 = vpop.xlane.xlu0 %160
  %v162 = vadd.f32 %v73, %v74
  %163 = vadd.xlane.f32.xlu0 %v162
  %v164 = vpop.xlane.xlu0 %163
  %v165 = vadd.f32 %v75, %v76
  %166 = vadd.xlane.f32.xlu0 %v165
  %v167 = vpop.xlane.xlu0 %166
  %v168 = vadd.f32 %v77, %v78
  %169 = vadd.xlane.f32.xlu0 %v168
  %v170 = vpop.xlane.xlu0 %169
  %v171 = vadd.f32 %v79, %v80
  %172 = vadd.xlane.f32.xlu0 %v171
  %v173 = vpop.xlane.xlu0 %172
  %v174 = vadd.f32 %v81, %v82
  %175 = vadd.xlane.f32.xlu0 %v174
  %v176 = vpop.xlane.xlu0 %175
  %v177 = vadd.f32 %v83, %v84
  %178 = vadd.xlane.f32.xlu0 %v177
  %v179 = vpop.xlane.xlu0 %178
  %v180 = vadd.f32 %v85, %v86
  %181 = vadd.xlane.f32.xlu0 %v180
  %v182 = vpop.xlane.xlu0 %181
  %v183 = vmul.f32 %v89, 0.00390625
  %v184 = vmul.f32 %v92, 0.00390625
  %v185 = vmul.f32 %v95, 0.00390625
  %v186 = vmul.f32 %v98, 0.00390625
  %v187 = vmul.f32 %v101, 0.00390625
  %v188 = vmul.f32 %v104, 0.00390625
  %v189 = vmul.f32 %v107, 0.00390625
  %v190 = vmul.f32 %v110, 0.00390625
  %v191 = vmul.f32 %v113, 0.00390625
  %v192 = vmul.f32 %v116, 0.00390625
  %v193 = vmul.f32 %v119, 0.00390625
  %v194 = vmul.f32 %v122, 0.00390625
  %v195 = vmul.f32 %v125, 0.00390625
  %v196 = vmul.f32 %v128, 0.00390625
  %v197 = vmul.f32 %v131, 0.00390625
  %v198 = vmul.f32 %v134, 0.00390625
  %v199 = vmul.f32 %v137, 0.00390625
  %v200 = vmul.f32 %v140, 0.00390625
  %v201 = vmul.f32 %v143, 0.00390625
  %v202 = vmul.f32 %v146, 0.00390625
  %v203 = vmul.f32 %v149, 0.00390625
  %v204 = vmul.f32 %v152, 0.00390625
  %v205 = vmul.f32 %v155, 0.00390625
  %v206 = vmul.f32 %v158, 0.00390625
  %v207 = vmul.f32 %v161, 0.00390625
  %v208 = vmul.f32 %v164, 0.00390625
  %v209 = vmul.f32 %v167, 0.00390625
  %v210 = vmul.f32 %v170, 0.00390625
  %v211 = vmul.f32 %v173, 0.00390625
  %v212 = vmul.f32 %v176, 0.00390625
  %v213 = vmul.f32 %v179, 0.00390625
  %v214 = vmul.f32 %v182, 0.00390625
  %v215 = vld [vmem:[%s1] sm:$0xff]
  %v216 = vld [vmem:[%s1 + $0x8] sm:$0xff]
  %v217 = vld [vmem:[%s1 + $0x10] sm:$0xff]
  %v218 = vld [vmem:[%s1 + $0x18] sm:$0xff]
  %v219 = vld [vmem:[%s1 + $0x20] sm:$0xff]
  %v220 = vld [vmem:[%s1 + $0x28] sm:$0xff]
  %v221 = vld [vmem:[%s1 + $0x30] sm:$0xff]
  %v222 = vld [vmem:[%s1 + $0x38] sm:$0xff]
  %v223 = vld [vmem:[%s1 + $0x40] sm:$0xff]
  %v224 = vld [vmem:[%s1 + $0x48] sm:$0xff]
  %v225 = vld [vmem:[%s1 + $0x50] sm:$0xff]
  %v226 = vld [vmem:[%s1 + $0x58] sm:$0xff]
  %v227 = vld [vmem:[%s1 + $0x60] sm:$0xff]
  %v228 = vld [vmem:[%s1 + $0x68] sm:$0xff]
  %v229 = vld [vmem:[%s1 + $0x70] sm:$0xff]
  %v230 = vld [vmem:[%s1 + $0x78] sm:$0xff]
  %v231 = vld [vmem:[%s2] sm:$0x1]
  %v233 = vlaneseq
  %v234 = vshrl.u32 %v233, 7
  %v235 = vsub.s32 0, %v234
  %v236 = vrot.slane %v231, %v235
  %v270 = vlaneseq
  %v271 = vand.u32 %v270, 127
  %v272 = vlaneseq
  %v273 = vshrl.u32 %v272, 7
  %v274 = vsub.s32 %v271, %v273
  %v275 = vrot.slane %v183, %v274
  %v276 = vadd.s32 %v271, 4294967288
  %v277 = vlaneseq
  %v278 = vshrl.u32 %v277, 7
  %v279 = vsub.s32 %v276, %v278
  %v280 = vrot.slane %v184, %v279
  %vm281 = vcmask 130112
  %v282 = vsel %vm281, %v280, %v275
  %v283 = vadd.s32 %v271, 4294967280
  %v284 = vlaneseq
  %v285 = vshrl.u32 %v284, 7
  %v286 = vsub.s32 %v283, %v285
  %v287 = vrot.slane %v185, %v286
  %vm288 = vcmask 195712
  %v289 = vsel %vm288, %v287, %v282
  %v290 = vadd.s32 %v271, 4294967272
  %v291 = vlaneseq
  %v292 = vshrl.u32 %v291, 7
  %v293 = vsub.s32 %v290, %v292
  %v294 = vrot.slane %v186, %v293
  %vm295 = vcmask 261312
  %v296 = vsel %vm295, %v294, %v289
  %v297 = vadd.s32 %v271, 4294967264
  %v298 = vlaneseq
  %v299 = vshrl.u32 %v298, 7
  %v300 = vsub.s32 %v297, %v299
  %v301 = vrot.slane %v187, %v300
  %vm302 = vcmask 326912
  %v303 = vsel %vm302, %v301, %v296
  %v304 = vadd.s32 %v271, 4294967256
  %v305 = vlaneseq
  %v306 = vshrl.u32 %v305, 7
  %v307 = vsub.s32 %v304, %v306
  %v308 = vrot.slane %v188, %v307
  %vm309 = vcmask 392512
  %v310 = vsel %vm309, %v308, %v303
  %v311 = vadd.s32 %v271, 4294967248
  %v312 = vlaneseq
  %v313 = vshrl.u32 %v312, 7
  %v314 = vsub.s32 %v311, %v313
  %v315 = vrot.slane %v189, %v314
  %vm316 = vcmask 458112
  %v317 = vsel %vm316, %v315, %v310
  %v318 = vadd.s32 %v271, 4294967240
  %v319 = vlaneseq
  %v320 = vshrl.u32 %v319, 7
  %v321 = vsub.s32 %v318, %v320
  %v322 = vrot.slane %v190, %v321
  %vm323 = vcmask 523712
  %v324 = vsel %vm323, %v322, %v317
  %v325 = vadd.s32 %v271, 4294967232
  %v326 = vlaneseq
  %v327 = vshrl.u32 %v326, 7
  %v328 = vsub.s32 %v325, %v327
  %v329 = vrot.slane %v191, %v328
  %vm330 = vcmask 589312
  %v331 = vsel %vm330, %v329, %v324
  %v332 = vadd.s32 %v271, 4294967224
  %v333 = vlaneseq
  %v334 = vshrl.u32 %v333, 7
  %v335 = vsub.s32 %v332, %v334
  %v336 = vrot.slane %v192, %v335
  %vm337 = vcmask 654912
  %v338 = vsel %vm337, %v336, %v331
  %v339 = vadd.s32 %v271, 4294967216
  %v340 = vlaneseq
  %v341 = vshrl.u32 %v340, 7
  %v342 = vsub.s32 %v339, %v341
  %v343 = vrot.slane %v193, %v342
  %vm344 = vcmask 720512
  %v345 = vsel %vm344, %v343, %v338
  %v346 = vadd.s32 %v271, 4294967208
  %v347 = vlaneseq
  %v348 = vshrl.u32 %v347, 7
  %v349 = vsub.s32 %v346, %v348
  %v350 = vrot.slane %v194, %v349
  %vm351 = vcmask 786112
  %v352 = vsel %vm351, %v350, %v345
  %v353 = vadd.s32 %v271, 4294967200
  %v354 = vlaneseq
  %v355 = vshrl.u32 %v354, 7
  %v356 = vsub.s32 %v353, %v355
  %v357 = vrot.slane %v195, %v356
  %vm358 = vcmask 851712
  %v359 = vsel %vm358, %v357, %v352
  %v360 = vadd.s32 %v271, 4294967192
  %v361 = vlaneseq
  %v362 = vshrl.u32 %v361, 7
  %v363 = vsub.s32 %v360, %v362
  %v364 = vrot.slane %v196, %v363
  %vm365 = vcmask 917312
  %v366 = vsel %vm365, %v364, %v359
  %v367 = vadd.s32 %v271, 4294967184
  %v368 = vlaneseq
  %v369 = vshrl.u32 %v368, 7
  %v370 = vsub.s32 %v367, %v369
  %v371 = vrot.slane %v197, %v370
  %vm372 = vcmask 982912
  %v373 = vsel %vm372, %v371, %v366
  %v374 = vadd.s32 %v271, 4294967176
  %v375 = vlaneseq
  %v376 = vshrl.u32 %v375, 7
  %v377 = vsub.s32 %v374, %v376
  %v378 = vrot.slane %v198, %v377
  %vm379 = vcmask 1048512
  %v380 = vsel %vm379, %v378, %v373
  %v381 = vlaneseq
  %v382 = vshrl.u32 %v381, 7
  %v383 = vsub.s32 %v271, %v382
  %v384 = vrot.slane %v199, %v383
  %v385 = vlaneseq
  %v386 = vshrl.u32 %v385, 7
  %v387 = vsub.s32 %v276, %v386
  %v388 = vrot.slane %v200, %v387
  %v389 = vsel %vm281, %v388, %v384
  %v390 = vlaneseq
  %v391 = vshrl.u32 %v390, 7
  %v392 = vsub.s32 %v283, %v391
  %v393 = vrot.slane %v201, %v392
  %v394 = vsel %vm288, %v393, %v389
  %v395 = vlaneseq
  %v396 = vshrl.u32 %v395, 7
  %v397 = vsub.s32 %v290, %v396
  %v398 = vrot.slane %v202, %v397
  %v399 = vsel %vm295, %v398, %v394
  %v400 = vlaneseq
  %v401 = vshrl.u32 %v400, 7
  %v402 = vsub.s32 %v297, %v401
  %v403 = vrot.slane %v203, %v402
  %v404 = vsel %vm302, %v403, %v399
  %v405 = vlaneseq
  %v406 = vshrl.u32 %v405, 7
  %v407 = vsub.s32 %v304, %v406
  %v408 = vrot.slane %v204, %v407
  %v409 = vsel %vm309, %v408, %v404
  %v410 = vlaneseq
  %v411 = vshrl.u32 %v410, 7
  %v412 = vsub.s32 %v311, %v411
  %v413 = vrot.slane %v205, %v412
  %v414 = vsel %vm316, %v413, %v409
  %v415 = vlaneseq
  %v416 = vshrl.u32 %v415, 7
  %v417 = vsub.s32 %v318, %v416
  %v418 = vrot.slane %v206, %v417
  %v419 = vsel %vm323, %v418, %v414
  %v420 = vlaneseq
  %v421 = vshrl.u32 %v420, 7
  %v422 = vsub.s32 %v325, %v421
  %v423 = vrot.slane %v207, %v422
  %v424 = vsel %vm330, %v423, %v419
  %v425 = vlaneseq
  %v426 = vshrl.u32 %v425, 7
  %v427 = vsub.s32 %v332, %v426
  %v428 = vrot.slane %v208, %v427
  %v429 = vsel %vm337, %v428, %v424
  %v430 = vlaneseq
  %v431 = vshrl.u32 %v430, 7
  %v432 = vsub.s32 %v339, %v431
  %v433 = vrot.slane %v209, %v432
  %v434 = vsel %vm344, %v433, %v429
  %v435 = vlaneseq
  %v436 = vshrl.u32 %v435, 7
  %v437 = vsub.s32 %v346, %v436
  %v438 = vrot.slane %v210, %v437
  %v439 = vsel %vm351, %v438, %v434
  %v440 = vlaneseq
  %v441 = vshrl.u32 %v440, 7
  %v442 = vsub.s32 %v353, %v441
  %v443 = vrot.slane %v211, %v442
  %v444 = vsel %vm358, %v443, %v439
  %v445 = vlaneseq
  %v446 = vshrl.u32 %v445, 7
  %v447 = vsub.s32 %v360, %v446
  %v448 = vrot.slane %v212, %v447
  %v449 = vsel %vm365, %v448, %v444
  %v450 = vlaneseq
  %v451 = vshrl.u32 %v450, 7
  %v452 = vsub.s32 %v367, %v451
  %v453 = vrot.slane %v213, %v452
  %v454 = vsel %vm372, %v453, %v449
  %v455 = vlaneseq
  %v456 = vshrl.u32 %v455, 7
  %v457 = vsub.s32 %v374, %v456
  %v458 = vrot.slane %v214, %v457
  %v459 = vsel %vm379, %v458, %v454
  %vm460 = vcmask 1041409
  %v461 = vsel %vm460, %v459, %v380
  %463 = vmatprep.subr.mxu0 0.0
  %464 = vmatpush1.msra.mxu0 %v215
  %465 = vmatprep.subr.mxu0 0.0
  %466 = vmatpush1.msra.mxu0 %v216
  %467 = vmatprep.subr.mxu0 0.0
  %468 = vmatpush1.msra.mxu0 %v217
  %469 = vmatprep.subr.mxu0 0.0
  %470 = vmatpush1.msra.mxu0 %v218
  %471 = vmatprep.subr.mxu0 0.0
  %472 = vmatpush1.msra.mxu0 %v219
  %473 = vmatprep.subr.mxu0 0.0
  %474 = vmatpush1.msra.mxu0 %v220
  %475 = vmatprep.subr.mxu0 0.0
  %476 = vmatpush1.msra.mxu0 %v221
  %477 = vmatprep.subr.mxu0 0.0
  %478 = vmatpush1.msra.mxu0 %v222
  %479 = vmatprep.subr.mxu0 0.0
  %480 = vmatpush1.msra.mxu0 %v223
  %481 = vmatprep.subr.mxu0 0.0
  %482 = vmatpush1.msra.mxu0 %v224
  %483 = vmatprep.subr.mxu0 0.0
  %484 = vmatpush1.msra.mxu0 %v225
  %485 = vmatprep.subr.mxu0 0.0
  %486 = vmatpush1.msra.mxu0 %v226
  %487 = vmatprep.subr.mxu0 0.0
  %488 = vmatpush1.msra.mxu0 %v227
  %489 = vmatprep.subr.mxu0 0.0
  %490 = vmatpush1.msra.mxu0 %v228
  %491 = vmatprep.subr.mxu0 0.0
  %492 = vmatpush1.msra.mxu0 %v229
  %493 = vmatprep.subr.mxu0 0.0
  %494 = vmatpush1.msra.mxu0 %v230
  %495 = vmatprep.subr.mxu0 0.0
  %496 = vmatpush1.msra.mxu0 0.0
  %497 = vmatprep.subr.mxu0 0.0
  %498 = vmatpush1.msra.mxu0 0.0
  %499 = vmatprep.subr.mxu0 0.0
  %500 = vmatpush1.msra.mxu0 0.0
  %501 = vmatprep.subr.mxu0 0.0
  %502 = vmatpush1.msra.mxu0 0.0
  %503 = vmatprep.subr.mxu0 0.0
  %504 = vmatpush1.msra.mxu0 0.0
  %505 = vmatprep.subr.mxu0 0.0
  %506 = vmatpush1.msra.mxu0 0.0
  %507 = vmatprep.subr.mxu0 0.0
  %508 = vmatpush1.msra.mxu0 0.0
  %509 = vmatprep.subr.mxu0 0.0
  %510 = vmatpush1.msra.mxu0 0.0
  %511 = vmatprep.subr.mxu0 0.0
  %512 = vmatpush1.msra.mxu0 0.0
  %513 = vmatprep.subr.mxu0 0.0
  %514 = vmatpush1.msra.mxu0 0.0
  %515 = vmatprep.subr.mxu0 0.0
  %516 = vmatpush1.msra.mxu0 0.0
  %517 = vmatprep.subr.mxu0 0.0
  %518 = vmatpush1.msra.mxu0 0.0
  %519 = vmatprep.subr.mxu0 0.0
  %520 = vmatpush1.msra.mxu0 0.0
  %521 = vmatprep.subr.mxu0 0.0
  %522 = vmatpush1.msra.mxu0 0.0
  %523 = vmatprep.subr.mxu0 0.0
  %524 = vmatpush1.msra.mxu0 0.0
  %525 = vmatprep.subr.mxu0 0.0
  %526 = vmatpush1.msra.mxu0 0.0
  %527 = vmatprep.mubr.f32.mxu0 0.0
  %528 = vmatmul.mubr.f32.gmra.mrb[0].mxu0 %v461
  %v529 = vpop.f32.mrb[0].mxu0
  %v530 = vadd.f32 %v236, %v529
  %v531 = vpop.f32.mrb[0].mxu0
  %532 = vdwg.mxu0
  %vm533 = vcmp.ge.f32.partialorder %v530, 0.0
  %v534 = vld [vmem:[%s3] sm:$0x1]
  %v536 = vlaneseq
  %v537 = vshrl.u32 %v536, 7
  %v538 = vsub.s32 0, %v537
  %v539 = vrot.slane %v534, %v538
  %v541 = vmul.f32 %v539, %v530
  %v542 = vsel %vm533, %v530, %v541
  %v543 = vld [vmem:[%s4] sm:$0xff]
  %v544 = vld [vmem:[%s5] sm:$0x1]
  %v546 = vlaneseq
  %v547 = vshrl.u32 %v546, 7
  %v548 = vsub.s32 0, %v547
  %v549 = vrot.slane %v544, %v548
  %vm551 = vcmask 64512
  %v553 = vsel %vm551, %v542, 0
  %555 = vmatprep.subr.mxu0 0.0
  %556 = vmatpush1.msra.mxu0 %v543
  %557 = vmatprep.subr.mxu0 0.0
  %558 = vmatpush1.msra.mxu0 0.0
  %559 = vmatprep.subr.mxu0 0.0
  %560 = vmatpush1.msra.mxu0 0.0
  %561 = vmatprep.subr.mxu0 0.0
  %562 = vmatpush1.msra.mxu0 0.0
  %563 = vmatprep.subr.mxu0 0.0
  %564 = vmatpush1.msra.mxu0 0.0
  %565 = vmatprep.subr.mxu0 0.0
  %566 = vmatpush1.msra.mxu0 0.0
  %567 = vmatprep.subr.mxu0 0.0
  %568 = vmatpush1.msra.mxu0 0.0
  %569 = vmatprep.subr.mxu0 0.0
  %570 = vmatpush1.msra.mxu0 0.0
  %571 = vmatprep.subr.mxu0 0.0
  %572 = vmatpush1.msra.mxu0 0.0
  %573 = vmatprep.subr.mxu0 0.0
  %574 = vmatpush1.msra.mxu0 0.0
  %575 = vmatprep.subr.mxu0 0.0
  %576 = vmatpush1.msra.mxu0 0.0
  %577 = vmatprep.subr.mxu0 0.0
  %578 = vmatpush1.msra.mxu0 0.0
  %579 = vmatprep.subr.mxu0 0.0
  %580 = vmatpush1.msra.mxu0 0.0
  %581 = vmatprep.subr.mxu0 0.0
  %582 = vmatpush1.msra.mxu0 0.0
  %583 = vmatprep.subr.mxu0 0.0
  %584 = vmatpush1.msra.mxu0 0.0
  %585 = vmatprep.subr.mxu0 0.0
  %586 = vmatpush1.msra.mxu0 0.0
  %587 = vmatprep.subr.mxu0 0.0
  %588 = vmatpush1.msra.mxu0 0.0
  %589 = vmatprep.subr.mxu0 0.0
  %590 = vmatpush1.msra.mxu0 0.0
  %591 = vmatprep.subr.mxu0 0.0
  %592 = vmatpush1.msra.mxu0 0.0
  %593 = vmatprep.subr.mxu0 0.0
  %594 = vmatpush1.msra.mxu0 0.0
  %595 = vmatprep.subr.mxu0 0.0
  %596 = vmatpush1.msra.mxu0 0.0
  %597 = vmatprep.subr.mxu0 0.0
  %598 = vmatpush1.msra.mxu0 0.0
  %599 = vmatprep.subr.mxu0 0.0
  %600 = vmatpush1.msra.mxu0 0.0
  %601 = vmatprep.subr.mxu0 0.0
  %602 = vmatpush1.msra.mxu0 0.0
  %603 = vmatprep.subr.mxu0 0.0
  %604 = vmatpush1.msra.mxu0 0.0
  %605 = vmatprep.subr.mxu0 0.0
  %606 = vmatpush1.msra.mxu0 0.0
  %607 = vmatprep.subr.mxu0 0.0
  %608 = vmatpush1.msra.mxu0 0.0
  %609 = vmatprep.subr.mxu0 0.0
  %610 = vmatpush1.msra.mxu0 0.0
  %611 = vmatprep.subr.mxu0 0.0
  %612 = vmatpush1.msra.mxu0 0.0
  %613 = vmatprep.subr.mxu0 0.0
  %614 = vmatpush1.msra.mxu0 0.0
  %615 = vmatprep.subr.mxu0 0.0
  %616 = vmatpush1.msra.mxu0 0.0
  %617 = vmatprep.subr.mxu0 0.0
  %618 = vmatpush1.msra.mxu0 0.0
  %619 = vmatprep.mubr.f32.mxu0 0.0
  %620 = vmatmul.mubr.f32.gmra.mrb[0].mxu0 %v553
  %v621 = vpop.f32.mrb[0].mxu0
  %v622 = vadd.f32 %v549, %v621
  %v623 = vpop.f32.mrb[0].mxu0
  %624 = vdwg.mxu0
  %v625 = vxor.u32 %v622, 2147483648
  %v626 = vmul.f32 %v625, 1.442695
  %v627 = vpow.pop %v626
  %v628 = vadd.f32 %v627, 1.0
  %v629 = vrcp.pop %v628
  %v630 = vmul.f32 1.0, %v629
  %v631 = vlaneseq
  %v632 = vshrl.u32 %v631, 7
  %v633 = vsub.s32 0, %v632
  %v634 = vrot.slane %v630, %v633
  %636 = vbcast.lane.b32.xlu0 %v634, 256
  %v637 = vpop.permute.xlu0 %636
  %s639 = sor.u32 256, 8
  %640 = vbcast.lane.b32.xlu0 %v634, %s639
  %v641 = vpop.permute.xlu0 %640
  %s643 = sor.u32 256, 16
  %644 = vbcast.lane.b32.xlu0 %v634, %s643
  %v645 = vpop.permute.xlu0 %644
  %s647 = sor.u32 256, 24
  %648 = vbcast.lane.b32.xlu0 %v634, %s647
  %v649 = vpop.permute.xlu0 %648
  %s651 = sor.u32 256, 32
  %652 = vbcast.lane.b32.xlu0 %v634, %s651
  %v653 = vpop.permute.xlu0 %652
  %s655 = sor.u32 256, 40
  %656 = vbcast.lane.b32.xlu0 %v634, %s655
  %v657 = vpop.permute.xlu0 %656
  %s659 = sor.u32 256, 48
  %660 = vbcast.lane.b32.xlu0 %v634, %s659
  %v661 = vpop.permute.xlu0 %660
  %s663 = sor.u32 256, 56
  %664 = vbcast.lane.b32.xlu0 %v634, %s663
  %v665 = vpop.permute.xlu0 %664
  %s667 = sor.u32 256, 64
  %668 = vbcast.lane.b32.xlu0 %v634, %s667
  %v669 = vpop.permute.xlu0 %668
  %s671 = sor.u32 256, 72
  %672 = vbcast.lane.b32.xlu0 %v634, %s671
  %v673 = vpop.permute.xlu0 %672
  %s675 = sor.u32 256, 80
  %676 = vbcast.lane.b32.xlu0 %v634, %s675
  %v677 = vpop.permute.xlu0 %676
  %s679 = sor.u32 256, 88
  %680 = vbcast.lane.b32.xlu0 %v634, %s679
  %v681 = vpop.permute.xlu0 %680
  %s683 = sor.u32 256, 96
  %684 = vbcast.lane.b32.xlu0 %v634, %s683
  %v685 = vpop.permute.xlu0 %684
  %s687 = sor.u32 256, 104
  %688 = vbcast.lane.b32.xlu0 %v634, %s687
  %v689 = vpop.permute.xlu0 %688
  %s691 = sor.u32 256, 112
  %692 = vbcast.lane.b32.xlu0 %v634, %s691
  %v693 = vpop.permute.xlu0 %692
  %s695 = sor.u32 256, 120
  %696 = vbcast.lane.b32.xlu0 %v634, %s695
  %v697 = vpop.permute.xlu0 %696
  %v698 = vlaneseq
  %v699 = vshrl.u32 %v698, 7
  %v700 = vsub.s32 1, %v699
  %v701 = vrot.slane %v630, %v700
  %703 = vbcast.lane.b32.xlu0 %v701, 256
  %v704 = vpop.permute.xlu0 %703
  %s706 = sor.u32 256, 8
  %707 = vbcast.lane.b32.xlu0 %v701, %s706
  %v708 = vpop.permute.xlu0 %707
  %s710 = sor.u32 256, 16
  %711 = vbcast.lane.b32.xlu0 %v701, %s710
  %v712 = vpop.permute.xlu0 %711
  %s714 = sor.u32 256, 24
  %715 = vbcast.lane.b32.xlu0 %v701, %s714
  %v716 = vpop.permute.xlu0 %715
  %s718 = sor.u32 256, 32
  %719 = vbcast.lane.b32.xlu0 %v701, %s718
  %v720 = vpop.permute.xlu0 %719
  %s722 = sor.u32 256, 40
  %723 = vbcast.lane.b32.xlu0 %v701, %s722
  %v724 = vpop.permute.xlu0 %723
  %s726 = sor.u32 256, 48
  %727 = vbcast.lane.b32.xlu0 %v701, %s726
  %v728 = vpop.permute.xlu0 %727
  %s730 = sor.u32 256, 56
  %731 = vbcast.lane.b32.xlu0 %v701, %s730
  %v732 = vpop.permute.xlu0 %731
  %s734 = sor.u32 256, 64
  %735 = vbcast.lane.b32.xlu0 %v701, %s734
  %v736 = vpop.permute.xlu0 %735
  %s738 = sor.u32 256, 72
  %739 = vbcast.lane.b32.xlu0 %v701, %s738
  %v740 = vpop.permute.xlu0 %739
  %s742 = sor.u32 256, 80
  %743 = vbcast.lane.b32.xlu0 %v701, %s742
  %v744 = vpop.permute.xlu0 %743
  %s746 = sor.u32 256, 88
  %747 = vbcast.lane.b32.xlu0 %v701, %s746
  %v748 = vpop.permute.xlu0 %747
  %s750 = sor.u32 256, 96
  %751 = vbcast.lane.b32.xlu0 %v701, %s750
  %v752 = vpop.permute.xlu0 %751
  %s754 = sor.u32 256, 104
  %755 = vbcast.lane.b32.xlu0 %v701, %s754
  %v756 = vpop.permute.xlu0 %755
  %s758 = sor.u32 256, 112
  %759 = vbcast.lane.b32.xlu0 %v701, %s758
  %v760 = vpop.permute.xlu0 %759
  %s762 = sor.u32 256, 120
  %763 = vbcast.lane.b32.xlu0 %v701, %s762
  %v764 = vpop.permute.xlu0 %763
  %v765 = vmul.f32 %v23, %v637
  %v766 = vmul.f32 %v24, %v637
  %v767 = vmul.f32 %v25, %v641
  %v768 = vmul.f32 %v26, %v641
  %v769 = vmul.f32 %v27, %v645
  %v770 = vmul.f32 %v28, %v645
  %v771 = vmul.f32 %v29, %v649
  %v772 = vmul.f32 %v30, %v649
  %v773 = vmul.f32 %v31, %v653
  %v774 = vmul.f32 %v32, %v653
  %v775 = vmul.f32 %v33, %v657
  %v776 = vmul.f32 %v34, %v657
  %v777 = vmul.f32 %v35, %v661
  %v778 = vmul.f32 %v36, %v661
  %v779 = vmul.f32 %v37, %v665
  %v780 = vmul.f32 %v38, %v665
  %v781 = vmul.f32 %v39, %v669
  %v782 = vmul.f32 %v40, %v669
  %v783 = vmul.f32 %v41, %v673
  %v784 = vmul.f32 %v42, %v673
  %v785 = vmul.f32 %v43, %v677
  %v786 = vmul.f32 %v44, %v677
  %v787 = vmul.f32 %v45, %v681
  %v788 = vmul.f32 %v46, %v681
  %v789 = vmul.f32 %v47, %v685
  %v790 = vmul.f32 %v48, %v685
  %v791 = vmul.f32 %v49, %v689
  %v792 = vmul.f32 %v50, %v689
  %v793 = vmul.f32 %v51, %v693
  %v794 = vmul.f32 %v52, %v693
  %v795 = vmul.f32 %v53, %v697
  %v796 = vmul.f32 %v54, %v697
  %v797 = vmul.f32 %v55, %v704
  %v798 = vmul.f32 %v56, %v704
  %v799 = vmul.f32 %v57, %v708
  %v800 = vmul.f32 %v58, %v708
  %v801 = vmul.f32 %v59, %v712
  %v802 = vmul.f32 %v60, %v712
  %v803 = vmul.f32 %v61, %v716
  %v804 = vmul.f32 %v62, %v716
  %v805 = vmul.f32 %v63, %v720
  %v806 = vmul.f32 %v64, %v720
  %v807 = vmul.f32 %v65, %v724
  %v808 = vmul.f32 %v66, %v724
  %v809 = vmul.f32 %v67, %v728
  %v810 = vmul.f32 %v68, %v728
  %v811 = vmul.f32 %v69, %v732
  %v812 = vmul.f32 %v70, %v732
  %v813 = vmul.f32 %v71, %v736
  %v814 = vmul.f32 %v72, %v736
  %v815 = vmul.f32 %v73, %v740
  %v816 = vmul.f32 %v74, %v740
  %v817 = vmul.f32 %v75, %v744
  %v818 = vmul.f32 %v76, %v744
  %v819 = vmul.f32 %v77, %v748
  %v820 = vmul.f32 %v78, %v748
  %v821 = vmul.f32 %v79, %v752
  %v822 = vmul.f32 %v80, %v752
  %v823 = vmul.f32 %v81, %v756
  %v824 = vmul.f32 %v82, %v756
  %v825 = vmul.f32 %v83, %v760
  %v826 = vmul.f32 %v84, %v760
  %v827 = vmul.f32 %v85, %v764
  %v828 = vmul.f32 %v86, %v764
  %829 = vst [vmem:[%s6] sm:$0xff] %v765
  %830 = vst [vmem:[%s6 + $0x8] sm:$0xff] %v766
  %831 = vst [vmem:[%s6 + $0x10] sm:$0xff] %v767
  %832 = vst [vmem:[%s6 + $0x18] sm:$0xff] %v768
  %833 = vst [vmem:[%s6 + $0x20] sm:$0xff] %v769
  %834 = vst [vmem:[%s6 + $0x28] sm:$0xff] %v770
  %835 = vst [vmem:[%s6 + $0x30] sm:$0xff] %v771
  %836 = vst [vmem:[%s6 + $0x38] sm:$0xff] %v772
  %837 = vst [vmem:[%s6 + $0x40] sm:$0xff] %v773
  %838 = vst [vmem:[%s6 + $0x48] sm:$0xff] %v774
  %839 = vst [vmem:[%s6 + $0x50] sm:$0xff] %v775
  %840 = vst [vmem:[%s6 + $0x58] sm:$0xff] %v776
  %841 = vst [vmem:[%s6 + $0x60] sm:$0xff] %v777
  %842 = vst [vmem:[%s6 + $0x68] sm:$0xff] %v778
  %843 = vst [vmem:[%s6 + $0x70] sm:$0xff] %v779
  %844 = vst [vmem:[%s6 + $0x78] sm:$0xff] %v780
  %845 = vst [vmem:[%s6 + $0x80] sm:$0xff] %v781
  %846 = vst [vmem:[%s6 + $0x88] sm:$0xff] %v782
  %847 = vst [vmem:[%s6 + $0x90] sm:$0xff] %v783
  %848 = vst [vmem:[%s6 + $0x98] sm:$0xff] %v784
  %849 = vst [vmem:[%s6 + $0xa0] sm:$0xff] %v785
  %850 = vst [vmem:[%s6 + $0xa8] sm:$0xff] %v786
  %851 = vst [vmem:[%s6 + $0xb0] sm:$0xff] %v787
  %852 = vst [vmem:[%s6 + $0xb8] sm:$0xff] %v788
  %853 = vst [vmem:[%s6 + $0xc0] sm:$0xff] %v789
  %854 = vst [vmem:[%s6 + $0xc8] sm:$0xff] %v790
  %855 = vst [vmem:[%s6 + $0xd0] sm:$0xff] %v791
  %856 = vst [vmem:[%s6 + $0xd8] sm:$0xff] %v792
  %857 = vst [vmem:[%s6 + $0xe0] sm:$0xff] %v793
  %858 = vst [vmem:[%s6 + $0xe8] sm:$0xff] %v794
  %859 = vst [vmem:[%s6 + $0xf0] sm:$0xff] %v795
  %860 = vst [vmem:[%s6 + $0xf8] sm:$0xff] %v796
  %861 = vst [vmem:[%s6 + $0x100] sm:$0xff] %v797
  %862 = vst [vmem:[%s6 + $0x108] sm:$0xff] %v798
  %863 = vst [vmem:[%s6 + $0x110] sm:$0xff] %v799
  %864 = vst [vmem:[%s6 + $0x118] sm:$0xff] %v800
  %865 = vst [vmem:[%s6 + $0x120] sm:$0xff] %v801
  %866 = vst [vmem:[%s6 + $0x128] sm:$0xff] %v802
  %867 = vst [vmem:[%s6 + $0x130] sm:$0xff] %v803
  %868 = vst [vmem:[%s6 + $0x138] sm:$0xff] %v804
  %869 = vst [vmem:[%s6 + $0x140] sm:$0xff] %v805
  %870 = vst [vmem:[%s6 + $0x148] sm:$0xff] %v806
  %871 = vst [vmem:[%s6 + $0x150] sm:$0xff] %v807
  %872 = vst [vmem:[%s6 + $0x158] sm:$0xff] %v808
  %873 = vst [vmem:[%s6 + $0x160] sm:$0xff] %v809
  %874 = vst [vmem:[%s6 + $0x168] sm:$0xff] %v810
  %875 = vst [vmem:[%s6 + $0x170] sm:$0xff] %v811
  %876 = vst [vmem:[%s6 + $0x178] sm:$0xff] %v812
  %877 = vst [vmem:[%s6 + $0x180] sm:$0xff] %v813
  %878 = vst [vmem:[%s6 + $0x188] sm:$0xff] %v814
  %879 = vst [vmem:[%s6 + $0x190] sm:$0xff] %v815
  %880 = vst [vmem:[%s6 + $0x198] sm:$0xff] %v816
  %881 = vst [vmem:[%s6 + $0x1a0] sm:$0xff] %v817
  %882 = vst [vmem:[%s6 + $0x1a8] sm:$0xff] %v818
  %883 = vst [vmem:[%s6 + $0x1b0] sm:$0xff] %v819
  %884 = vst [vmem:[%s6 + $0x1b8] sm:$0xff] %v820
  %885 = vst [vmem:[%s6 + $0x1c0] sm:$0xff] %v821
  %886 = vst [vmem:[%s6 + $0x1c8] sm:$0xff] %v822
  %887 = vst [vmem:[%s6 + $0x1d0] sm:$0xff] %v823
  %888 = vst [vmem:[%s6 + $0x1d8] sm:$0xff] %v824
  %889 = vst [vmem:[%s6 + $0x1e0] sm:$0xff] %v825
  %890 = vst [vmem:[%s6 + $0x1e8] sm:$0xff] %v826
  %891 = vst [vmem:[%s6 + $0x1f0] sm:$0xff] %v827
  %892 = vst [vmem:[%s6 + $0x1f8] sm:$0xff] %v828
  // Predicated region
  $region26: #{se_block.1} parent=0 // pred_check
    _
  $region27: #{se_block.1} parent=0 // pred_check_branch
    %894 = sbr.rel (0) target = $region29
  $region28: #{se_block.1} parent=0 // pred_region
    _
  $region29: #{se_block.1} parent=0 // pred_fallthru
    _
  // Predicated region
  $region30: #{se_block.1} parent=0 // pred_check
    _
  $region31: #{se_block.1} parent=0 // pred_check_branch
    %896 = sbr.rel (0) target = $region33
  $region32: #{se_block.1} parent=0 // pred_region
    _
  $region33: #{se_block.1} parent=0 // pred_fallthru
    _

</llo_original>
